<compile_context>
chip_gen: v5e
topology: v5e:2x2
jax: 0.10.0
libtpu: 0.0.40
codegen_flags: <defaults>
</compile_context>

<pallas_src>
import jax
import jax.numpy as jnp
from jax.experimental import pallas as pl
from jax.experimental.pallas import tpu as pltpu

_LANES = 128
_TARGET_BLOCK_BYTES = 4 * 1024 * 1024      # ~4 MiB blocks: near HBM roofline on all gens
_VMEM_LIMIT_BYTES = 32 * 1024 * 1024       # explicit scoped-VMEM budget (safe v5e..v7x)


def _copy_kernel(x_ref, o_ref):
    o_ref[...] = x_ref[...]


def _sublane_multiple(dtype) -> int:
    # 8 for 32-bit, 16 for bf16/f16, 32 for int8/fp8 (packed sublane tiles).
    itemsize = jnp.dtype(dtype).itemsize
    return 8 * max(1, 4 // itemsize)


def _cost(x) -> pl.CostEstimate:
    nbytes = int(x.size) * jnp.dtype(x.dtype).itemsize
    return pl.CostEstimate(flops=0, transcendentals=0, bytes_accessed=2 * nbytes)


def _params(n_grid_dims: int) -> pltpu.CompilerParams:
    return pltpu.CompilerParams(
        dimension_semantics=("parallel",) * n_grid_dims,
        vmem_limit_bytes=_VMEM_LIMIT_BYTES,
    )


def _copy_aligned_3d(x3, sub):
    """Tiled copy of (L, R, C) with R % sub == 0 and C % 128 == 0 (no relayout)."""
    L, R, C = x3.shape
    itemsize = jnp.dtype(x3.dtype).itemsize
    target_elems = max(sub * _LANES, _TARGET_BLOCK_BYTES // itemsize)

    # Budget: lanes first, then sublanes, then leading dim.  All block dims are
    # (sub, 128)-multiples, so every load/store is an unmasked full vreg.
    bc = min(C, max(_LANES, ((target_elems // sub) // _LANES) * _LANES))
    br = min(R, max(sub, ((target_elems // bc) // sub) * sub))
    bl = min(L, max(1, target_elems // (bc * br)))

    grid = (pl.cdiv(L, bl), pl.cdiv(R, br), pl.cdiv(C, bc))
    spec = pl.BlockSpec((bl, br, bc), lambda l, i, j: (l, i, j))
    return pl.pallas_call(
        _copy_kernel,
        out_shape=jax.ShapeDtypeStruct(x3.shape, x3.dtype),
        grid=grid,
        in_specs=[spec],
        out_specs=spec,
        compiler_params=_params(3),
        cost_estimate=_cost(x3),
    )(x3)


def _copy_slab_3d(x3, padded_slab_bytes):
    """Copy (L, R, C) with full-extent (possibly unaligned) trailing dims,
    blocking over the leading dim to reach the target block size."""
    L, R, C = x3.shape
    bl = min(L, max(1, _TARGET_BLOCK_BYTES // padded_slab_bytes))
    spec = pl.BlockSpec((bl, R, C), lambda i: (i, 0, 0))
    return pl.pallas_call(
        _copy_kernel,
        out_shape=jax.ShapeDtypeStruct(x3.shape, x3.dtype),
        grid=(pl.cdiv(L, bl),),
        in_specs=[spec],
        out_specs=spec,
        compiler_params=_params(1),
        cost_estimate=_cost(x3),
    )(x3)


def _copy_flat_1d(x):
    """Lane-blocked copy of a flat 1-D view (handles any total size; blocks are
    bounded so VMEM can never overflow)."""
    flat = x.reshape(-1)
    n = flat.shape[0]
    itemsize = jnp.dtype(x.dtype).itemsize
    tile = _sublane_multiple(x.dtype) * _LANES
    if n <= tile:
        block = n                                        # full-extent block
    else:
        block = max(tile, ((_TARGET_BLOCK_BYTES // itemsize) // tile) * tile)
        block = min(block, (n // tile) * tile)           # tile-multiple <= n
    spec = pl.BlockSpec((block,), lambda i: (i,))
    out = pl.pallas_call(
        _copy_kernel,
        out_shape=jax.ShapeDtypeStruct((n,), x.dtype),
        grid=(pl.cdiv(n, block),),
        in_specs=[spec],
        out_specs=spec,
        compiler_params=_params(1),
        cost_estimate=_cost(x),
    )(flat)
    return out.reshape(x.shape)


def identity(x, *, materialize=True):
    """Pallas TPU implementation of Identity.forward: returns x.

    materialize=False returns `x` unchanged (the zero-cost implementation —
    no HBM traffic at all).  materialize=True (default) produces the result
    through a tiled Pallas copy kernel.
    """
    if not materialize or x.ndim == 0 or x.size == 0:
        return x

    if x.ndim == 1:
        return _copy_flat_1d(x)

    sub = _sublane_multiple(x.dtype)
    itemsize = jnp.dtype(x.dtype).itemsize
    R, C = x.shape[-2], x.shape[-1]
    lead = 1
    for d in x.shape[:-2]:
        lead *= int(d)

    # Merging leading dims keeps the minor-two-dim layout: a free reshape.
    x3 = x.reshape(lead, R, C)

    # Path A: trailing dims already (sublane, lane)-aligned -> tile them.
    if C % _LANES == 0 and R % sub == 0:
        return _copy_aligned_3d(x3, sub).reshape(x.shape)

    # Path B: unaligned trailing dims, but one (R, C) slab (padded to the
    # (sub, 128) layout) fits in a block -> block over the leading dim with
    # full-extent trailing dims.  No relayout, always layout-legal.
    padded_slab = (pl.cdiv(R, sub) * sub) * (pl.cdiv(C, _LANES) * _LANES) * itemsize
    if padded_slab <= _TARGET_BLOCK_BYTES:
        return _copy_slab_3d(x3, padded_slab).reshape(x.shape)

    # Path C: huge, unaligned trailing dims.  Accept one relayout from the
    # flatten and copy in bounded lane-dense 1-D blocks (never overflows VMEM).
    return _copy_flat_1d(x)


if __name__ == "__main__":
    key = jax.random.PRNGKey(0)
    N, C, H, W = 2, 4, 16, 16
    x = jax.random.normal(key, (N, C, H, W), dtype=jnp.float32)

    out = jax.block_until_ready(identity(x))
    assert out.shape == x.shape, (out.shape, x.shape)
    assert out.dtype == x.dtype, (out.dtype, x.dtype)
    assert bool(jnp.array_equal(out, x)), float(jnp.max(jnp.abs(out - x)))

    # Also exercise the (sublane, lane)-aligned tiled path once.
    x2 = jax.random.normal(jax.random.PRNGKey(0), (2, 16, 256), dtype=jnp.float32)
    out2 = jax.block_until_ready(identity(x2))
    assert bool(jnp.array_equal(out2, x2))

    print("KERNEL_OK")
</pallas_src>

<mosaic_0001>
module attributes {stable_mosaic.version = 11 : i64} {
  func.func @_copy_kernel(%arg0: i32, %arg1: memref<8x16x16xf32, #tpu.memory_space<vmem>>, %arg2: memref<8x16x16xf32, #tpu.memory_space<vmem>>) attributes {dimension_semantics = [#tpu.dimension_semantics<parallel>], iteration_bounds = array<i64: 1>, scalar_prefetch = 0 : i64, scratch_operands = 0 : i64, tpu.core_type = #tpu.core_type<tc>, window_params = [{transform_indices = @transform_0, window_bounds = array<i64: 8, 16, 16>}, {transform_indices = @transform_1, window_bounds = array<i64: 8, 16, 16>}]} {
    %c0 = arith.constant 0 : index
    %c0_0 = arith.constant 0 : index
    %c0_1 = arith.constant 0 : index
    %0 = vector.load %arg1[%c0, %c0_0, %c0_1] : memref<8x16x16xf32, #tpu.memory_space<vmem>>, vector<8x16x16xf32>
    %c0_2 = arith.constant 0 : index
    %c0_3 = arith.constant 0 : index
    %c0_4 = arith.constant 0 : index
    %1 = vector.load %arg2[%c0_2, %c0_3, %c0_4] : memref<8x16x16xf32, #tpu.memory_space<vmem>>, vector<8x16x16xf32>
    tpu.vector_store %arg2[%c0_2, %c0_3, %c0_4], %0 {strides = array<i32>} : memref<8x16x16xf32, #tpu.memory_space<vmem>>, vector<8x16x16xf32>,
    return
  }
  func.func @transform_0(%arg0: i32) -> (i32, i32, i32) {
    %c0_i32 = arith.constant 0 : i32
    %c0_i32_0 = arith.constant 0 : i32
    %c0_i32_1 = arith.constant 0 : i32
    return %arg0, %c0_i32, %c0_i32_0 : i32, i32, i32
  }
  func.func @transform_1(%arg0: i32) -> (i32, i32, i32) {
    %c0_i32 = arith.constant 0 : i32
    %c0_i32_0 = arith.constant 0 : i32
    %c0_i32_1 = arith.constant 0 : i32
    return %arg0, %c0_i32, %c0_i32_0 : i32, i32, i32
  }
}

</mosaic_0001>

<llo_original>
// kernel: tpu_custom_call.1
$region0: #{tpu_custom_call.1}
  #allocation0 [shape = 'u32[]', space=smem, size = 0x4, offset = 0x4, fixed_abs, tag = 'smem constant byte address 0x4 - core index']
  #allocation1 [shape = 'u32[72,128]{1,0:T(1,128)}', space=vmem, size = 0x9000, scoped, tag = 'internal scratch']
  %s0 = inlined_call_operand.hbm [shape: f32[8,16,16], index: 0, kind: input, shape index: {}]
  %s1 = inlined_call_operand.hbm [shape: f32[8,16,16], index: 1, kind: output, shape index: {}]
  %s2 = sld [smem:[#allocation0]]
  $region18: #{tpu_custom_call.1} parent=0
    _
  %s4 = ssub.s32 1, %s2
  %s5 = scalar_select 0, %s4, %s2
  $region1: #{tpu_custom_call.1} parent=0
    #allocation2 [shape = 'u8[65536]{0}', space=vmem, size = 0x10000, scoped, tag = 'input window, operand 0, single buffered']
    #allocation3 [shape = 's32[1]{0}', space=sflag, size = 0x4, scoped, tag = 'scoped memory for tpu_custom_call.1']
    #allocation4 [shape = 's32[1]{0}', space=sflag, size = 0x4, scoped, tag = 'scoped memory for tpu_custom_call.1']
    #allocation5 [shape = 'u8[65536]{0}', space=vmem, size = 0x10000, scoped, tag = 'output window, operand 0, single buffered']
    %6 = vsyncpa [#allocation3], 0
    %7 = vsyncpa [#allocation4], 0
    // Predicated region
    $region2: #{tpu_custom_call.1} parent=1 // pred_check
      _
    $region3: #{tpu_custom_call.1} parent=1 // pred_check_branch
      %9 = sbr.rel (0) target = $region5
    $region4: #{tpu_custom_call.1} parent=1 // pred_region
      %11 = vsyncadd [#allocation3], 0
      %s12 = sshll.u32 %s0, 4
      %s13 = int_to_ptr.hbm [resolvable:$true] %s12
      %s14 = sshll.u32 [#allocation2], 4
      %s15 = int_to_ptr.vmem [resolvable:$true] %s14
      %20 = dma.hbm_to_vmem [thread:$0]  %s13, 2048, %s15, [#allocation3], 128, 128, 8
    $region5: #{tpu_custom_call.1} parent=1 // pred_fallthru
      _
    // Predicated region
    $region6: #{tpu_custom_call.1} parent=1 // pred_check
      _
    $region7: #{tpu_custom_call.1} parent=1 // pred_check_branch
      %22 = sbr.rel (0) target = $region9
    $region8: #{tpu_custom_call.1} parent=1 // pred_region
      %24 = dma.done [#allocation3], 2048
    $region9: #{tpu_custom_call.1} parent=1 // pred_fallthru
      _
    %v25 = vld [vmem:[#allocation2] sm:$0xff]
    %v26 = vld [vmem:[#allocation2 + $0x8] sm:$0xff]
    %v27 = vld [vmem:[#allocation2 + $0x10] sm:$0xff]
    %v28 = vld [vmem:[#allocation2 + $0x18] sm:$0xff]
    %v29 = vld [vmem:[#allocation2 + $0x20] sm:$0xff]
    %v30 = vld [vmem:[#allocation2 + $0x28] sm:$0xff]
    %v31 = vld [vmem:[#allocation2 + $0x30] sm:$0xff]
    %v32 = vld [vmem:[#allocation2 + $0x38] sm:$0xff]
    %v33 = vld [vmem:[#allocation2 + $0x40] sm:$0xff]
    %v34 = vld [vmem:[#allocation2 + $0x48] sm:$0xff]
    %v35 = vld [vmem:[#allocation2 + $0x50] sm:$0xff]
    %v36 = vld [vmem:[#allocation2 + $0x58] sm:$0xff]
    %v37 = vld [vmem:[#allocation2 + $0x60] sm:$0xff]
    %v38 = vld [vmem:[#allocation2 + $0x68] sm:$0xff]
    %v39 = vld [vmem:[#allocation2 + $0x70] sm:$0xff]
    %v40 = vld [vmem:[#allocation2 + $0x78] sm:$0xff]
    %vm41 = vcmask 130048
    %42 = vst.msk [vmem:[#allocation5] sm:$0xff] %vm41, %v25
    %43 = vst.msk [vmem:[#allocation5 + $0x8] sm:$0xff] %vm41, %v26
    %44 = vst.msk [vmem:[#allocation5 + $0x10] sm:$0xff] %vm41, %v27
    %45 = vst.msk [vmem:[#allocation5 + $0x18] sm:$0xff] %vm41, %v28
    %46 = vst.msk [vmem:[#allocation5 + $0x20] sm:$0xff] %vm41, %v29
    %47 = vst.msk [vmem:[#allocation5 + $0x28] sm:$0xff] %vm41, %v30
    %48 = vst.msk [vmem:[#allocation5 + $0x30] sm:$0xff] %vm41, %v31
    %49 = vst.msk [vmem:[#allocation5 + $0x38] sm:$0xff] %vm41, %v32
    %50 = vst.msk [vmem:[#allocation5 + $0x40] sm:$0xff] %vm41, %v33
    %51 = vst.msk [vmem:[#allocation5 + $0x48] sm:$0xff] %vm41, %v34
    %52 = vst.msk [vmem:[#allocation5 + $0x50] sm:$0xff] %vm41, %v35
    %53 = vst.msk [vmem:[#allocation5 + $0x58] sm:$0xff] %vm41, %v36
    %54 = vst.msk [vmem:[#allocation5 + $0x60] sm:$0xff] %vm41, %v37
    %55 = vst.msk [vmem:[#allocation5 + $0x68] sm:$0xff] %vm41, %v38
    %56 = vst.msk [vmem:[#allocation5 + $0x70] sm:$0xff] %vm41, %v39
    %57 = vst.msk [vmem:[#allocation5 + $0x78] sm:$0xff] %vm41, %v40
    // Predicated region
    $region10: #{tpu_custom_call.1} parent=1 // pred_check
      _
    $region11: #{tpu_custom_call.1} parent=1 // pred_check_branch
      %59 = sbr.rel (0) target = $region13
    $region12: #{tpu_custom_call.1} parent=1 // pred_region
      %61 = vsyncadd [#allocation4], 0
      %s62 = sshll.u32 [#allocation5], 4
      %s63 = int_to_ptr.vmem [resolvable:$true] %s62
      %s64 = sshll.u32 %s1, 4
      %s65 = int_to_ptr.hbm [resolvable:$true] %s64
      %70 = dma.vmem_to_hbm [thread:$0]  %s63, 2048, %s65, [#allocation4], 128, 128, 8
    $region13: #{tpu_custom_call.1} parent=1 // pred_fallthru
      _
    // Predicated region
    $region14: #{tpu_custom_call.1} parent=1 // pred_check
      _
    $region15: #{tpu_custom_call.1} parent=1 // pred_check_branch
      %72 = sbr.rel (0) target = $region17
    $region16: #{tpu_custom_call.1} parent=1 // pred_region
      %74 = dma.done [#allocation4], 2048
    $region17: #{tpu_custom_call.1} parent=1 // pred_fallthru
      _
    %75 = vsyncpa [#allocation3], 1
    %76 = vsyncpa [#allocation4], 1

</llo_original>
